<compile_context>
chip_gen: v7x
topology: tpu7x:2x2x1
jax: 0.10.0
libtpu: 0.0.40
codegen_flags: <defaults>
</compile_context>

<pallas_src>
import jax
import jax.numpy as jnp
from jax.experimental import pallas as pl
from jax.experimental.pallas import tpu as pltpu

LANE = 128     # lane count
SUBLANE = 8    # sublane count


def _round_up(x, m):
    return (x + m - 1) // m * m


def _sigmoid_via_tanh(x):
    # sigmoid(x) == 0.5 * tanh(0.5 * x) + 0.5 : one native EUP tanh plus cheap
    # VPU fma instead of exp + divide on the serial per-step critical path.
    return 0.5 * jnp.tanh(0.5 * x) + 0.5


def _choose_batch_tile(batch):
    """Pick the batch tile: 8 for tiny batches, else fill the MXU M dim while
    keeping >=2 tiles so the 'parallel' grid axis can use both v7x cores."""
    if batch <= SUBLANE:
        return SUBLANE
    bt = min(256, _round_up(batch, SUBLANE))
    if batch > 2 * SUBLANE and _round_up(batch, bt) // bt < 2:
        bt = max(SUBLANE, _round_up(-(-batch // 2), SUBLANE))
    return bt


def _make_kernel(seq_len, in_dim, hidden, out_pad, offsets):
    """Build the per-batch-tile kernel (all sizes/offsets static)."""
    off_wih, off_whh, off_wout, off_bias, off_bout = offsets
    g4 = 4 * hidden

    def kernel(x_ref, params_ref, out_ref):
        # x_ref      : (T * BT, D)   rows ordered (t, local_batch), time-major
        # params_ref : (rows, lanes) packed parameter slab (one DMA)
        # out_ref    : (BT, P)       lane-dense padded output
        bt = out_ref.shape[0]

        # Static, sublane-aligned slices of the single parameter slab.
        wih = params_ref[off_wih:off_wih + in_dim, 0:g4]          # (D, 4H)
        whh = params_ref[off_whh:off_whh + hidden, 0:g4]          # (H, 4H)
        wout = params_ref[off_wout:off_wout + hidden, 0:out_pad]  # (H, P)
        bias = params_ref[off_bias:off_bias + 1, 0:g4]            # (1, 4H)
        bout = params_ref[off_bout:off_bout + 1, 0:out_pad]       # (1, P)

        # Input projection for ALL timesteps in one MXU pass; bias broadcast
        # hoisted out of the recurrence.
        xw = (jnp.dot(x_ref[...], wih, preferred_element_type=jnp.float32)
              + bias)                                             # (T*BT, 4H)

        h = jnp.zeros((bt, hidden), jnp.float32)
        c = jnp.zeros((bt, hidden), jnp.float32)
        hsum = jnp.zeros((bt, hidden), jnp.float32)

        # Time recurrence, fully unrolled at trace time (T static & small);
        # t*bt is sublane-aligned so every xw slice is a clean static slice.
        # NOTE: casting h/whh to bf16 for this dot is an optional per-chip
        # knob (f32 multi-passes the bf16 MXU on v5e/v6e); kept f32 here.
        for t in range(seq_len):
            gates = xw[t * bt:(t + 1) * bt] + jnp.dot(
                h, whh, preferred_element_type=jnp.float32)       # (BT, 4H)
            # Two full-vreg transcendental passes instead of four sub-vreg
            # ones; PyTorch gate order i, f, g, o.
            sg = _sigmoid_via_tanh(gates)
            tg = jnp.tanh(gates)
            i_g = sg[:, 0:hidden]
            f_g = sg[:, hidden:2 * hidden]
            g_g = tg[:, 2 * hidden:3 * hidden]
            o_g = sg[:, 3 * hidden:4 * hidden]
            c = f_g * c + i_g * g_g
            h = o_g * jnp.tanh(c)
            hsum = hsum + h                                       # sum over T

        feat = jnp.maximum(hsum, 0.0)                             # ReLU
        out_ref[...] = (jnp.dot(feat, wout,
                                preferred_element_type=jnp.float32)
                        + bout)                                   # out2tag

    return kernel


@jax.jit
def lstm_tagger_forward(x_btd, w_ih, w_hh, b_ih, b_hh, w_out, b_out):
    """x_btd: (B, T, D) float32, like the PyTorch batch_first LSTM input."""
    B, T, D = x_btd.shape
    H = w_hh.shape[1]                        # w_hh: (4H, H)
    target = w_out.shape[0]                  # w_out: (target, H)

    BT = _choose_batch_tile(B)
    Bp = _round_up(B, BT)
    nb = Bp // BT
    P = _round_up(max(target, LANE), LANE)   # lane-dense output slab
    g4 = 4 * H

    # (B,T,D) -> pad batch -> (nb, T*BT, D), rows ordered (t, local_batch).
    # TODO(synk): if this path is latency critical, have the upstream producer
    # emit x already in this time-major tiled layout to drop the pad/transpose.
    xp = jnp.pad(x_btd.astype(jnp.float32), ((0, Bp - B), (0, 0), (0, 0)))
    xg = xp.reshape(nb, BT, T, D).transpose(0, 2, 1, 3).reshape(nb, T * BT, D)

    # Pack all five parameter operands into ONE lane-dense slab (one DMA).
    # Every sub-block starts on a multiple-of-8 row.
    slab_lanes = _round_up(max(g4, P), LANE)
    off_wih = 0
    off_whh = off_wih + _round_up(D, SUBLANE)
    off_wout = off_whh + _round_up(H, SUBLANE)
    off_bias = off_wout + _round_up(H, SUBLANE)
    off_bout = off_bias + SUBLANE
    rows = off_bout + SUBLANE

    params = jnp.zeros((rows, slab_lanes), jnp.float32)
    params = params.at[off_wih:off_wih + D, :g4].set(
        w_ih.T.astype(jnp.float32))
    params = params.at[off_whh:off_whh + H, :g4].set(
        w_hh.T.astype(jnp.float32))
    params = params.at[off_wout:off_wout + H, :target].set(
        w_out.T.astype(jnp.float32))
    params = params.at[off_bias, :g4].set((b_ih + b_hh).astype(jnp.float32))
    params = params.at[off_bout, :target].set(b_out.astype(jnp.float32))

    kernel = _make_kernel(T, D, H, P,
                          (off_wih, off_whh, off_wout, off_bias, off_bout))

    grid_spec = pltpu.PrefetchScalarGridSpec(
        num_scalar_prefetch=0,
        grid=(nb,),                                        # independent tiles
        in_specs=[
            pl.BlockSpec((pl.Squeezed(), T * BT, D),
                         lambda b: (b, 0, 0)),             # x, one batch tile
            pl.BlockSpec((rows, slab_lanes),
                         lambda b: (0, 0)),                # packed params slab
        ],
        out_specs=pl.BlockSpec((BT, P), lambda b: (b, 0)),
    )

    out_padded = pl.pallas_call(
        kernel,
        out_shape=jax.ShapeDtypeStruct((Bp, P), jnp.float32),
        grid_spec=grid_spec,
        compiler_params=pltpu.CompilerParams(
            dimension_semantics=("parallel",)),            # tiles -> megacore
    )(xg, params)

    return out_padded[:B, :target]


def lstm_tagger_reference(x_btd, w_ih, w_hh, b_ih, b_hh, w_out, b_out):
    """Pure-JAX reference matching PyTorch nn.LSTM + sum + ReLU + Linear."""
    B, T, D = x_btd.shape
    H = w_hh.shape[1]

    def step(carry, x_t):
        h, c = carry
        gates = x_t @ w_ih.T + h @ w_hh.T + b_ih + b_hh
        i = jax.nn.sigmoid(gates[:, 0:H])
        f = jax.nn.sigmoid(gates[:, H:2 * H])
        g = jnp.tanh(gates[:, 2 * H:3 * H])
        o = jax.nn.sigmoid(gates[:, 3 * H:4 * H])
        c = f * c + i * g
        h = o * jnp.tanh(c)
        return (h, c), h

    h0 = jnp.zeros((B, H), jnp.float32)
    c0 = jnp.zeros((B, H), jnp.float32)
    _, hs = jax.lax.scan(step, (h0, c0), jnp.transpose(x_btd, (1, 0, 2)))
    out = jnp.sum(hs, axis=0)
    out = jnp.maximum(out, 0.0)
    return out @ w_out.T + b_out


if __name__ == "__main__":
    # Shapes consistent with the module: batch=2, seq=8, input_dim=16,
    # hidden_dim=32, target_size=8.
    B, T, D, H, TARGET = 2, 8, 16, 32, 8

    key = jax.random.PRNGKey(0)
    ks = jax.random.split(key, 8)
    bound = 1.0 / jnp.sqrt(H)

    x = jax.random.normal(ks[0], (B, T, D), dtype=jnp.float32)
    w_ih = jax.random.uniform(ks[1], (4 * H, D), jnp.float32, -bound, bound)
    w_hh = jax.random.uniform(ks[2], (4 * H, H), jnp.float32, -bound, bound)
    b_ih = jax.random.uniform(ks[3], (4 * H,), jnp.float32, -bound, bound)
    b_hh = jax.random.uniform(ks[4], (4 * H,), jnp.float32, -bound, bound)
    w_out = jax.random.uniform(ks[5], (TARGET, H), jnp.float32, -bound, bound)
    b_out = jax.random.uniform(ks[6], (TARGET,), jnp.float32, -bound, bound)

    out = lstm_tagger_forward(x, w_ih, w_hh, b_ih, b_hh, w_out, b_out)
    out = jax.block_until_ready(out)

    ref = lstm_tagger_reference(x, w_ih, w_hh, b_ih, b_hh, w_out, b_out)
    assert out.shape == (B, TARGET)
    # Tolerance slightly loosened vs 1e-5: tanh-form sigmoid differs from the
    # reference's exp-form sigmoid at the ulp level across 8 recurrent steps.
    assert jnp.allclose(out, ref, atol=5e-5, rtol=5e-5), (out, ref)

    print("KERNEL_OK")
</pallas_src>

<mosaic_0001>
module attributes {stable_mosaic.version = 11 : i64} {
  func.func @kernel(%arg0: i32, %arg1: memref<1x64x16xf32, #tpu.memory_space<vmem>>, %arg2: memref<96x128xf32, #tpu.memory_space<vmem>>, %arg3: memref<8x128xf32, #tpu.memory_space<vmem>>) attributes {dimension_semantics = [#tpu.dimension_semantics<parallel>], iteration_bounds = array<i64: 1>, scalar_prefetch = 0 : i64, scratch_operands = 0 : i64, tpu.core_type = #tpu.core_type<tc>, window_params = [{transform_indices = @transform_0, window_bounds = array<i64: 1, 64, 16>}, {pipeline_mode = #tpu.pipeline_mode<synchronous>, transform_indices = @transform_1, window_bounds = array<i64: 96, 128>}, {transform_indices = @transform_2, window_bounds = array<i64: 8, 128>}]} {
    %c0 = arith.constant 0 : index
    %c0_0 = arith.constant 0 : index
    %0 = vector.load %arg2[%c0, %c0_0] : memref<96x128xf32, #tpu.memory_space<vmem>>, vector<16x128xf32>
    %c16 = arith.constant 16 : index
    %c0_1 = arith.constant 0 : index
    %1 = vector.load %arg2[%c16, %c0_1] : memref<96x128xf32, #tpu.memory_space<vmem>>, vector<32x128xf32>
    %c48 = arith.constant 48 : index
    %c0_2 = arith.constant 0 : index
    %2 = vector.load %arg2[%c48, %c0_2] : memref<96x128xf32, #tpu.memory_space<vmem>>, vector<32x128xf32>
    %c80 = arith.constant 80 : index
    %c0_3 = arith.constant 0 : index
    %3 = vector.load %arg2[%c80, %c0_3] : memref<96x128xf32, #tpu.memory_space<vmem>>, vector<1x128xf32>
    %c88 = arith.constant 88 : index
    %c0_4 = arith.constant 0 : index
    %4 = vector.load %arg2[%c88, %c0_4] : memref<96x128xf32, #tpu.memory_space<vmem>>, vector<1x128xf32>
    %c0_5 = arith.constant 0 : index
    %c0_6 = arith.constant 0 : index
    %c0_7 = arith.constant 0 : index
    %5 = vector.load %arg1[%c0_5, %c0_6, %c0_7] : memref<1x64x16xf32, #tpu.memory_space<vmem>>, vector<1x64x16xf32>
    %6 = vector.shape_cast %5 : vector<1x64x16xf32> to vector<64x16xf32>
    %cst = arith.constant dense<0.000000e+00> : vector<64x128xf32>
    %7 = tpu.matmul %6, %0, %cst {dimension_numbers = #tpu.dot_dimension_numbers<[1], [0], [0], [1], [0, 0, 1, 1], [], []>} : vector<64x16xf32>, vector<16x128xf32>, vector<64x128xf32> -> vector<64x128xf32>
    %8 = vector.broadcast %3 : vector<1x128xf32> to vector<64x128xf32>
    %9 = arith.addf %7, %8 : vector<64x128xf32>
    %cst_8 = arith.constant 0.000000e+00 : f32
    %10 = vector.broadcast %cst_8 : f32 to vector<8x32xf32>
    %cst_9 = arith.constant 0.000000e+00 : f32
    %11 = vector.broadcast %cst_9 : f32 to vector<8x32xf32>
    %cst_10 = arith.constant 0.000000e+00 : f32
    %12 = vector.broadcast %cst_10 : f32 to vector<8x32xf32>
    %13 = vector.extract_strided_slice %9 {offsets = [0, 0], sizes = [8, 128], strides = [1, 1]} : vector<64x128xf32> to vector<8x128xf32>
    %cst_11 = arith.constant dense<0.000000e+00> : vector<8x128xf32>
    %14 = tpu.matmul %10, %1, %cst_11 {dimension_numbers = #tpu.dot_dimension_numbers<[1], [0], [0], [1], [0, 0, 1, 1], [], []>} : vector<8x32xf32>, vector<32x128xf32>, vector<8x128xf32> -> vector<8x128xf32>
    %15 = arith.addf %13, %14 : vector<8x128xf32>
    %cst_12 = arith.constant 5.000000e-01 : f32
    %16 = vector.broadcast %cst_12 : f32 to vector<8x128xf32>
    %17 = arith.mulf %16, %15 : vector<8x128xf32>
    %18 = math.tanh %17 : vector<8x128xf32>
    %cst_13 = arith.constant 5.000000e-01 : f32
    %19 = vector.broadcast %cst_13 : f32 to vector<8x128xf32>
    %20 = arith.mulf %19, %18 : vector<8x128xf32>
    %cst_14 = arith.constant 5.000000e-01 : f32
    %21 = vector.broadcast %cst_14 : f32 to vector<8x128xf32>
    %22 = arith.addf %20, %21 : vector<8x128xf32>
    %23 = math.tanh %15 : vector<8x128xf32>
    %24 = vector.extract_strided_slice %22 {offsets = [0, 0], sizes = [8, 32], strides = [1, 1]} : vector<8x128xf32> to vector<8x32xf32>
    %25 = vector.extract_strided_slice %22 {offsets = [0, 32], sizes = [8, 32], strides = [1, 1]} : vector<8x128xf32> to vector<8x32xf32>
    %26 = vector.extract_strided_slice %23 {offsets = [0, 64], sizes = [8, 32], strides = [1, 1]} : vector<8x128xf32> to vector<8x32xf32>
    %27 = vector.extract_strided_slice %22 {offsets = [0, 96], sizes = [8, 32], strides = [1, 1]} : vector<8x128xf32> to vector<8x32xf32>
    %28 = arith.mulf %25, %11 : vector<8x32xf32>
    %29 = arith.mulf %24, %26 : vector<8x32xf32>
    %30 = arith.addf %28, %29 : vector<8x32xf32>
    %31 = math.tanh %30 : vector<8x32xf32>
    %32 = arith.mulf %27, %31 : vector<8x32xf32>
    %33 = arith.addf %12, %32 : vector<8x32xf32>
    %34 = vector.extract_strided_slice %9 {offsets = [8, 0], sizes = [8, 128], strides = [1, 1]} : vector<64x128xf32> to vector<8x128xf32>
    %cst_15 = arith.constant dense<0.000000e+00> : vector<8x128xf32>
    %35 = tpu.matmul %32, %1, %cst_15 {dimension_numbers = #tpu.dot_dimension_numbers<[1], [0], [0], [1], [0, 0, 1, 1], [], []>} : vector<8x32xf32>, vector<32x128xf32>, vector<8x128xf32> -> vector<8x128xf32>
    %36 = arith.addf %34, %35 : vector<8x128xf32>
    %cst_16 = arith.constant 5.000000e-01 : f32
    %37 = vector.broadcast %cst_16 : f32 to vector<8x128xf32>
    %38 = arith.mulf %37, %36 : vector<8x128xf32>
    %39 = math.tanh %38 : vector<8x128xf32>
    %cst_17 = arith.constant 5.000000e-01 : f32
    %40 = vector.broadcast %cst_17 : f32 to vector<8x128xf32>
    %41 = arith.mulf %40, %39 : vector<8x128xf32>
    %cst_18 = arith.constant 5.000000e-01 : f32
    %42 = vector.broadcast %cst_18 : f32 to vector<8x128xf32>
    %43 = arith.addf %41, %42 : vector<8x128xf32>
    %44 = math.tanh %36 : vector<8x128xf32>
    %45 = vector.extract_strided_slice %43 {offsets = [0, 0], sizes = [8, 32], strides = [1, 1]} : vector<8x128xf32> to vector<8x32xf32>
    %46 = vector.extract_strided_slice %43 {offsets = [0, 32], sizes = [8, 32], strides = [1, 1]} : vector<8x128xf32> to vector<8x32xf32>
    %47 = vector.extract_strided_slice %44 {offsets = [0, 64], sizes = [8, 32], strides = [1, 1]} : vector<8x128xf32> to vector<8x32xf32>
    %48 = vector.extract_strided_slice %43 {offsets = [0, 96], sizes = [8, 32], strides = [1, 1]} : vector<8x128xf32> to vector<8x32xf32>
    %49 = arith.mulf %46, %30 : vector<8x32xf32>
    %50 = arith.mulf %45, %47 : vector<8x32xf32>
    %51 = arith.addf %49, %50 : vector<8x32xf32>
    %52 = math.tanh %51 : vector<8x32xf32>
    %53 = arith.mulf %48, %52 : vector<8x32xf32>
    %54 = arith.addf %33, %53 : vector<8x32xf32>
    %55 = vector.extract_strided_slice %9 {offsets = [16, 0], sizes = [8, 128], strides = [1, 1]} : vector<64x128xf32> to vector<8x128xf32>
    %cst_19 = arith.constant dense<0.000000e+00> : vector<8x128xf32>
    %56 = tpu.matmul %53, %1, %cst_19 {dimension_numbers = #tpu.dot_dimension_numbers<[1], [0], [0], [1], [0, 0, 1, 1], [], []>} : vector<8x32xf32>, vector<32x128xf32>, vector<8x128xf32> -> vector<8x128xf32>
    %57 = arith.addf %55, %56 : vector<8x128xf32>
    %cst_20 = arith.constant 5.000000e-01 : f32
    %58 = vector.broadcast %cst_20 : f32 to vector<8x128xf32>
    %59 = arith.mulf %58, %57 : vector<8x128xf32>
    %60 = math.tanh %59 : vector<8x128xf32>
    %cst_21 = arith.constant 5.000000e-01 : f32
    %61 = vector.broadcast %cst_21 : f32 to vector<8x128xf32>
    %62 = arith.mulf %61, %60 : vector<8x128xf32>
    %cst_22 = arith.constant 5.000000e-01 : f32
    %63 = vector.broadcast %cst_22 : f32 to vector<8x128xf32>
    %64 = arith.addf %62, %63 : vector<8x128xf32>
    %65 = math.tanh %57 : vector<8x128xf32>
    %66 = vector.extract_strided_slice %64 {offsets = [0, 0], sizes = [8, 32], strides = [1, 1]} : vector<8x128xf32> to vector<8x32xf32>
    %67 = vector.extract_strided_slice %64 {offsets = [0, 32], sizes = [8, 32], strides = [1, 1]} : vector<8x128xf32> to vector<8x32xf32>
    %68 = vector.extract_strided_slice %65 {offsets = [0, 64], sizes = [8, 32], strides = [1, 1]} : vector<8x128xf32> to vector<8x32xf32>
    %69 = vector.extract_strided_slice %64 {offsets = [0, 96], sizes = [8, 32], strides = [1, 1]} : vector<8x128xf32> to vector<8x32xf32>
    %70 = arith.mulf %67, %51 : vector<8x32xf32>
    %71 = arith.mulf %66, %68 : vector<8x32xf32>
    %72 = arith.addf %70, %71 : vector<8x32xf32>
    %73 = math.tanh %72 : vector<8x32xf32>
    %74 = arith.mulf %69, %73 : vector<8x32xf32>
    %75 = arith.addf %54, %74 : vector<8x32xf32>
    %76 = vector.extract_strided_slice %9 {offsets = [24, 0], sizes = [8, 128], strides = [1, 1]} : vector<64x128xf32> to vector<8x128xf32>
    %cst_23 = arith.constant dense<0.000000e+00> : vector<8x128xf32>
    %77 = tpu.matmul %74, %1, %cst_23 {dimension_numbers = #tpu.dot_dimension_numbers<[1], [0], [0], [1], [0, 0, 1, 1], [], []>} : vector<8x32xf32>, vector<32x128xf32>, vector<8x128xf32> -> vector<8x128xf32>
    %78 = arith.addf %76, %77 : vector<8x128xf32>
    %cst_24 = arith.constant 5.000000e-01 : f32
    %79 = vector.broadcast %cst_24 : f32 to vector<8x128xf32>
    %80 = arith.mulf %79, %78 : vector<8x128xf32>
    %81 = math.tanh %80 : vector<8x128xf32>
    %cst_25 = arith.constant 5.000000e-01 : f32
    %82 = vector.broadcast %cst_25 : f32 to vector<8x128xf32>
    %83 = arith.mulf %82, %81 : vector<8x128xf32>
    %cst_26 = arith.constant 5.000000e-01 : f32
    %84 = vector.broadcast %cst_26 : f32 to vector<8x128xf32>
    %85 = arith.addf %83, %84 : vector<8x128xf32>
    %86 = math.tanh %78 : vector<8x128xf32>
    %87 = vector.extract_strided_slice %85 {offsets = [0, 0], sizes = [8, 32], strides = [1, 1]} : vector<8x128xf32> to vector<8x32xf32>
    %88 = vector.extract_strided_slice %85 {offsets = [0, 32], sizes = [8, 32], strides = [1, 1]} : vector<8x128xf32> to vector<8x32xf32>
    %89 = vector.extract_strided_slice %86 {offsets = [0, 64], sizes = [8, 32], strides = [1, 1]} : vector<8x128xf32> to vector<8x32xf32>
    %90 = vector.extract_strided_slice %85 {offsets = [0, 96], sizes = [8, 32], strides = [1, 1]} : vector<8x128xf32> to vector<8x32xf32>
    %91 = arith.mulf %88, %72 : vector<8x32xf32>
    %92 = arith.mulf %87, %89 : vector<8x32xf32>
    %93 = arith.addf %91, %92 : vector<8x32xf32>
    %94 = math.tanh %93 : vector<8x32xf32>
    %95 = arith.mulf %90, %94 : vector<8x32xf32>
    %96 = arith.addf %75, %95 : vector<8x32xf32>
    %97 = vector.extract_strided_slice %9 {offsets = [32, 0], sizes = [8, 128], strides = [1, 1]} : vector<64x128xf32> to vector<8x128xf32>
    %cst_27 = arith.constant dense<0.000000e+00> : vector<8x128xf32>
    %98 = tpu.matmul %95, %1, %cst_27 {dimension_numbers = #tpu.dot_dimension_numbers<[1], [0], [0], [1], [0, 0, 1, 1], [], []>} : vector<8x32xf32>, vector<32x128xf32>, vector<8x128xf32> -> vector<8x128xf32>
    %99 = arith.addf %97, %98 : vector<8x128xf32>
    %cst_28 = arith.constant 5.000000e-01 : f32
    %100 = vector.broadcast %cst_28 : f32 to vector<8x128xf32>
    %101 = arith.mulf %100, %99 : vector<8x128xf32>
    %102 = math.tanh %101 : vector<8x128xf32>
    %cst_29 = arith.constant 5.000000e-01 : f32
    %103 = vector.broadcast %cst_29 : f32 to vector<8x128xf32>
    %104 = arith.mulf %103, %102 : vector<8x128xf32>
    %cst_30 = arith.constant 5.000000e-01 : f32
    %105 = vector.broadcast %cst_30 : f32 to vector<8x128xf32>
    %106 = arith.addf %104, %105 : vector<8x128xf32>
    %107 = math.tanh %99 : vector<8x128xf32>
    %108 = vector.extract_strided_slice %106 {offsets = [0, 0], sizes = [8, 32], strides = [1, 1]} : vector<8x128xf32> to vector<8x32xf32>
    %109 = vector.extract_strided_slice %106 {offsets = [0, 32], sizes = [8, 32], strides = [1, 1]} : vector<8x128xf32> to vector<8x32xf32>
    %110 = vector.extract_strided_slice %107 {offsets = [0, 64], sizes = [8, 32], strides = [1, 1]} : vector<8x128xf32> to vector<8x32xf32>
    %111 = vector.extract_strided_slice %106 {offsets = [0, 96], sizes = [8, 32], strides = [1, 1]} : vector<8x128xf32> to vector<8x32xf32>
    %112 = arith.mulf %109, %93 : vector<8x32xf32>
    %113 = arith.mulf %108, %110 : vector<8x32xf32>
    %114 = arith.addf %112, %113 : vector<8x32xf32>
    %115 = math.tanh %114 : vector<8x32xf32>
    %116 = arith.mulf %111, %115 : vector<8x32xf32>
    %117 = arith.addf %96, %116 : vector<8x32xf32>
    %118 = vector.extract_strided_slice %9 {offsets = [40, 0], sizes = [8, 128], strides = [1, 1]} : vector<64x128xf32> to vector<8x128xf32>
    %cst_31 = arith.constant dense<0.000000e+00> : vector<8x128xf32>
    %119 = tpu.matmul %116, %1, %cst_31 {dimension_numbers = #tpu.dot_dimension_numbers<[1], [0], [0], [1], [0, 0, 1, 1], [], []>} : vector<8x32xf32>, vector<32x128xf32>, vector<8x128xf32> -> vector<8x128xf32>
    %120 = arith.addf %118, %119 : vector<8x128xf32>
    %cst_32 = arith.constant 5.000000e-01 : f32
    %121 = vector.broadcast %cst_32 : f32 to vector<8x128xf32>
    %122 = arith.mulf %121, %120 : vector<8x128xf32>
    %123 = math.tanh %122 : vector<8x128xf32>
    %cst_33 = arith.constant 5.000000e-01 : f32
    %124 = vector.broadcast %cst_33 : f32 to vector<8x128xf32>
    %125 = arith.mulf %124, %123 : vector<8x128xf32>
    %cst_34 = arith.constant 5.000000e-01 : f32
    %126 = vector.broadcast %cst_34 : f32 to vector<8x128xf32>
    %127 = arith.addf %125, %126 : vector<8x128xf32>
    %128 = math.tanh %120 : vector<8x128xf32>
    %129 = vector.extract_strided_slice %127 {offsets = [0, 0], sizes = [8, 32], strides = [1, 1]} : vector<8x128xf32> to vector<8x32xf32>
    %130 = vector.extract_strided_slice %127 {offsets = [0, 32], sizes = [8, 32], strides = [1, 1]} : vector<8x128xf32> to vector<8x32xf32>
    %131 = vector.extract_strided_slice %128 {offsets = [0, 64], sizes = [8, 32], strides = [1, 1]} : vector<8x128xf32> to vector<8x32xf32>
    %132 = vector.extract_strided_slice %127 {offsets = [0, 96], sizes = [8, 32], strides = [1, 1]} : vector<8x128xf32> to vector<8x32xf32>
    %133 = arith.mulf %130, %114 : vector<8x32xf32>
    %134 = arith.mulf %129, %131 : vector<8x32xf32>
    %135 = arith.addf %133, %134 : vector<8x32xf32>
    %136 = math.tanh %135 : vector<8x32xf32>
    %137 = arith.mulf %132, %136 : vector<8x32xf32>
    %138 = arith.addf %117, %137 : vector<8x32xf32>
    %139 = vector.extract_strided_slice %9 {offsets = [48, 0], sizes = [8, 128], strides = [1, 1]} : vector<64x128xf32> to vector<8x128xf32>
    %cst_35 = arith.constant dense<0.000000e+00> : vector<8x128xf32>
    %140 = tpu.matmul %137, %1, %cst_35 {dimension_numbers = #tpu.dot_dimension_numbers<[1], [0], [0], [1], [0, 0, 1, 1], [], []>} : vector<8x32xf32>, vector<32x128xf32>, vector<8x128xf32> -> vector<8x128xf32>
    %141 = arith.addf %139, %140 : vector<8x128xf32>
    %cst_36 = arith.constant 5.000000e-01 : f32
    %142 = vector.broadcast %cst_36 : f32 to vector<8x128xf32>
    %143 = arith.mulf %142, %141 : vector<8x128xf32>
    %144 = math.tanh %143 : vector<8x128xf32>
    %cst_37 = arith.constant 5.000000e-01 : f32
    %145 = vector.broadcast %cst_37 : f32 to vector<8x128xf32>
    %146 = arith.mulf %145, %144 : vector<8x128xf32>
    %cst_38 = arith.constant 5.000000e-01 : f32
    %147 = vector.broadcast %cst_38 : f32 to vector<8x128xf32>
    %148 = arith.addf %146, %147 : vector<8x128xf32>
    %149 = math.tanh %141 : vector<8x128xf32>
    %150 = vector.extract_strided_slice %148 {offsets = [0, 0], sizes = [8, 32], strides = [1, 1]} : vector<8x128xf32> to vector<8x32xf32>
    %151 = vector.extract_strided_slice %148 {offsets = [0, 32], sizes = [8, 32], strides = [1, 1]} : vector<8x128xf32> to vector<8x32xf32>
    %152 = vector.extract_strided_slice %149 {offsets = [0, 64], sizes = [8, 32], strides = [1, 1]} : vector<8x128xf32> to vector<8x32xf32>
    %153 = vector.extract_strided_slice %148 {offsets = [0, 96], sizes = [8, 32], strides = [1, 1]} : vector<8x128xf32> to vector<8x32xf32>
    %154 = arith.mulf %151, %135 : vector<8x32xf32>
    %155 = arith.mulf %150, %152 : vector<8x32xf32>
    %156 = arith.addf %154, %155 : vector<8x32xf32>
    %157 = math.tanh %156 : vector<8x32xf32>
    %158 = arith.mulf %153, %157 : vector<8x32xf32>
    %159 = arith.addf %138, %158 : vector<8x32xf32>
    %160 = vector.extract_strided_slice %9 {offsets = [56, 0], sizes = [8, 128], strides = [1, 1]} : vector<64x128xf32> to vector<8x128xf32>
    %cst_39 = arith.constant dense<0.000000e+00> : vector<8x128xf32>
    %161 = tpu.matmul %158, %1, %cst_39 {dimension_numbers = #tpu.dot_dimension_numbers<[1], [0], [0], [1], [0, 0, 1, 1], [], []>} : vector<8x32xf32>, vector<32x128xf32>, vector<8x128xf32> -> vector<8x128xf32>
    %162 = arith.addf %160, %161 : vector<8x128xf32>
    %cst_40 = arith.constant 5.000000e-01 : f32
    %163 = vector.broadcast %cst_40 : f32 to vector<8x128xf32>
    %164 = arith.mulf %163, %162 : vector<8x128xf32>
    %165 = math.tanh %164 : vector<8x128xf32>
    %cst_41 = arith.constant 5.000000e-01 : f32
    %166 = vector.broadcast %cst_41 : f32 to vector<8x128xf32>
    %167 = arith.mulf %166, %165 : vector<8x128xf32>
    %cst_42 = arith.constant 5.000000e-01 : f32
    %168 = vector.broadcast %cst_42 : f32 to vector<8x128xf32>
    %169 = arith.addf %167, %168 : vector<8x128xf32>
    %170 = math.tanh %162 : vector<8x128xf32>
    %171 = vector.extract_strided_slice %169 {offsets = [0, 0], sizes = [8, 32], strides = [1, 1]} : vector<8x128xf32> to vector<8x32xf32>
    %172 = vector.extract_strided_slice %169 {offsets = [0, 32], sizes = [8, 32], strides = [1, 1]} : vector<8x128xf32> to vector<8x32xf32>
    %173 = vector.extract_strided_slice %170 {offsets = [0, 64], sizes = [8, 32], strides = [1, 1]} : vector<8x128xf32> to vector<8x32xf32>
    %174 = vector.extract_strided_slice %169 {offsets = [0, 96], sizes = [8, 32], strides = [1, 1]} : vector<8x128xf32> to vector<8x32xf32>
    %175 = arith.mulf %172, %156 : vector<8x32xf32>
    %176 = arith.mulf %171, %173 : vector<8x32xf32>
    %177 = arith.addf %175, %176 : vector<8x32xf32>
    %178 = math.tanh %177 : vector<8x32xf32>
    %179 = arith.mulf %174, %178 : vector<8x32xf32>
    %180 = arith.addf %159, %179 : vector<8x32xf32>
    %cst_43 = arith.constant 0.000000e+00 : f32
    %181 = vector.broadcast %cst_43 : f32 to vector<8x32xf32>
    %182 = arith.maximumf %180, %181 : vector<8x32xf32>
    %cst_44 = arith.constant dense<0.000000e+00> : vector<8x128xf32>
    %183 = tpu.matmul %182, %2, %cst_44 {dimension_numbers = #tpu.dot_dimension_numbers<[1], [0], [0], [1], [0, 0, 1, 1], [], []>} : vector<8x32xf32>, vector<32x128xf32>, vector<8x128xf32> -> vector<8x128xf32>
    %184 = vector.broadcast %4 : vector<1x128xf32> to vector<8x128xf32>
    %185 = arith.addf %183, %184 : vector<8x128xf32>
    %c0_45 = arith.constant 0 : index
    %c0_46 = arith.constant 0 : index
    %186 = vector.load %arg3[%c0_45, %c0_46] : memref<8x128xf32, #tpu.memory_space<vmem>>, vector<8x128xf32>
    tpu.vector_store %arg3[%c0_45, %c0_46], %185 {strides = array<i32>} : memref<8x128xf32, #tpu.memory_space<vmem>>, vector<8x128xf32>,
    return
  }
  func.func @transform_0(%arg0: i32) -> (i32, i32, i32) {
    %c0_i32 = arith.constant 0 : i32
    %c0_i32_0 = arith.constant 0 : i32
    %c0_i32_1 = arith.constant 0 : i32
    return %arg0, %c0_i32, %c0_i32_0 : i32, i32, i32
  }
  func.func @transform_1(%arg0: i32) -> (i32, i32) {
    %c0_i32 = arith.constant 0 : i32
    %c0_i32_0 = arith.constant 0 : i32
    %c0_i32_1 = arith.constant 0 : i32
    return %c0_i32, %c0_i32_0 : i32, i32
  }
  func.func @transform_2(%arg0: i32) -> (i32, i32) {
    %c0_i32 = arith.constant 0 : i32
    %c0_i32_0 = arith.constant 0 : i32
    return %arg0, %c0_i32 : i32, i32
  }
}

</mosaic_0001>

<llo_original>
// kernel: lstm_tagger_forward.1
$region0: #{lstm_tagger_forward.1}
  #allocation0 [shape = 'u32[]', space=smem, size = 0x4, offset = 0x4, fixed_abs, tag = 'smem constant byte address 0x4 - core index']
  #allocation1 [shape = 'u32[144,128]{1,0:T(1,128)}', space=vmem, size = 0x12000, scoped, tag = 'internal scratch']
  %s0 = inlined_call_operand.vmem [shape: f32[1,64,16], index: 0, kind: input, shape index: {}]
  %s1 = inlined_call_operand.vmem [shape: f32[96,128], index: 1, kind: input, shape index: {}]
  %s2 = inlined_call_operand.vmem [shape: f32[8,128], index: 2, kind: output, shape index: {}]
  %s3 = sld [smem:[#allocation0]]
  $region18: #{lstm_tagger_forward.1} parent=0
    _
  %s5 = ssub.s32 1, %s3
  %s6 = scalar_select 0, %s5, %s3
  // Predicated region
  $region2: #{lstm_tagger_forward.1} parent=0 // pred_check
    _
  $region3: #{lstm_tagger_forward.1} parent=0 // pred_check_branch
    %8 = sbr.rel (0) target = $region5
  $region4: #{lstm_tagger_forward.1} parent=0 // pred_region
    _
  $region5: #{lstm_tagger_forward.1} parent=0 // pred_fallthru
    _
  // Predicated region
  $region6: #{lstm_tagger_forward.1} parent=0 // pred_check
    _
  $region7: #{lstm_tagger_forward.1} parent=0 // pred_check_branch
    %10 = sbr.rel (0) target = $region9
  $region8: #{lstm_tagger_forward.1} parent=0 // pred_region
    _
  $region9: #{lstm_tagger_forward.1} parent=0 // pred_fallthru
    _
  %v11 = vld [vmem:[%s1] sm:$0xff]
  %v12 = vld [vmem:[%s1 + $0x8] sm:$0xff]
  %v13 = vld [vmem:[%s1 + $0x10] sm:$0xff]
  %v14 = vld [vmem:[%s1 + $0x18] sm:$0xff]
  %v15 = vld [vmem:[%s1 + $0x20] sm:$0xff]
  %v16 = vld [vmem:[%s1 + $0x28] sm:$0xff]
  %v17 = vld [vmem:[%s1 + $0x30] sm:$0xff]
  %v18 = vld [vmem:[%s1 + $0x38] sm:$0xff]
  %v19 = vld [vmem:[%s1 + $0x40] sm:$0xff]
  %v20 = vld [vmem:[%s1 + $0x48] sm:$0xff]
  %v21 = vld [vmem:[%s1 + $0x50] sm:$0x1]
  %v22 = vld [vmem:[%s1 + $0x58] sm:$0x1]
  %v23 = vld [vmem:[%s0] sm:$0xff]
  %v24 = vld [vmem:[%s0 + $0x8] sm:$0xff]
  %v25 = vld [vmem:[%s0 + $0x10] sm:$0xff]
  %v26 = vld [vmem:[%s0 + $0x18] sm:$0xff]
  %v27 = vld [vmem:[%s0 + $0x20] sm:$0xff]
  %v28 = vld [vmem:[%s0 + $0x28] sm:$0xff]
  %v29 = vld [vmem:[%s0 + $0x30] sm:$0xff]
  %v30 = vld [vmem:[%s0 + $0x38] sm:$0xff]
  %v31 = vlaneseq
  %v32 = vshrl.u32 %v31, 7
  %v33 = vsub.s32 0, %v32
  %v34 = vrot.slane %v21, %v33
  %vm35 = vcmask 130048
  %v37 = vsel %vm35, %v23, 0
  %v40 = vsel %vm35, %v24, 0
  %v43 = vsel %vm35, %v25, 0
  %v46 = vsel %vm35, %v26, 0
  %v49 = vsel %vm35, %v27, 0
  %v52 = vsel %vm35, %v28, 0
  %v55 = vsel %vm35, %v29, 0
  %v58 = vsel %vm35, %v30, 0
  %60 = vmatprep.subr.mxu0 0.0
  %61 = vmatpush1.msra.mxu0 %v11
  %62 = vmatprep.subr.mxu0 0.0
  %63 = vmatpush1.msra.mxu0 %v12
  %64 = vmatprep.subr.mxu0 0.0
  %65 = vmatpush1.msra.mxu0 0.0
  %66 = vmatprep.subr.mxu0 0.0
  %67 = vmatpush1.msra.mxu0 0.0
  %68 = vmatprep.subr.mxu0 0.0
  %69 = vmatpush1.msra.mxu0 0.0
  %70 = vmatprep.subr.mxu0 0.0
  %71 = vmatpush1.msra.mxu0 0.0
  %72 = vmatprep.subr.mxu0 0.0
  %73 = vmatpush1.msra.mxu0 0.0
  %74 = vmatprep.subr.mxu0 0.0
  %75 = vmatpush1.msra.mxu0 0.0
  %76 = vmatprep.subr.mxu0 0.0
  %77 = vmatpush1.msra.mxu0 0.0
  %78 = vmatprep.subr.mxu0 0.0
  %79 = vmatpush1.msra.mxu0 0.0
  %80 = vmatprep.subr.mxu0 0.0
  %81 = vmatpush1.msra.mxu0 0.0
  %82 = vmatprep.subr.mxu0 0.0
  %83 = vmatpush1.msra.mxu0 0.0
  %84 = vmatprep.subr.mxu0 0.0
  %85 = vmatpush1.msra.mxu0 0.0
  %86 = vmatprep.subr.mxu0 0.0
  %87 = vmatpush1.msra.mxu0 0.0
  %88 = vmatprep.subr.mxu0 0.0
  %89 = vmatpush1.msra.mxu0 0.0
  %90 = vmatprep.subr.mxu0 0.0
  %91 = vmatpush1.msra.mxu0 0.0
  %92 = vmatprep.subr.mxu0 0.0
  %93 = vmatpush1.msra.mxu0 0.0
  %94 = vmatprep.subr.mxu0 0.0
  %95 = vmatpush1.msra.mxu0 0.0
  %96 = vmatprep.subr.mxu0 0.0
  %97 = vmatpush1.msra.mxu0 0.0
  %98 = vmatprep.subr.mxu0 0.0
  %99 = vmatpush1.msra.mxu0 0.0
  %100 = vmatprep.subr.mxu0 0.0
  %101 = vmatpush1.msra.mxu0 0.0
  %102 = vmatprep.subr.mxu0 0.0
  %103 = vmatpush1.msra.mxu0 0.0
  %104 = vmatprep.subr.mxu0 0.0
  %105 = vmatpush1.msra.mxu0 0.0
  %106 = vmatprep.subr.mxu0 0.0
  %107 = vmatpush1.msra.mxu0 0.0
  %108 = vmatprep.subr.mxu0 0.0
  %109 = vmatpush1.msra.mxu0 0.0
  %110 = vmatprep.subr.mxu0 0.0
  %111 = vmatpush1.msra.mxu0 0.0
  %112 = vmatprep.subr.mxu0 0.0
  %113 = vmatpush1.msra.mxu0 0.0
  %114 = vmatprep.subr.mxu0 0.0
  %115 = vmatpush1.msra.mxu0 0.0
  %116 = vmatprep.subr.mxu0 0.0
  %117 = vmatpush1.msra.mxu0 0.0
  %118 = vmatprep.subr.mxu0 0.0
  %119 = vmatpush1.msra.mxu0 0.0
  %120 = vmatprep.subr.mxu0 0.0
  %121 = vmatpush1.msra.mxu0 0.0
  %122 = vmatprep.subr.mxu0 0.0
  %123 = vmatpush1.msra.mxu0 0.0
  %124 = vmatprep.mubr.f32.mxu0 0.0
  %125 = vmatmul.mubr.f32.gmra.mrb[0].mxu0 %v37
  %v126 = vpop.f32.mrb[0].mxu0
  %v127 = vadd.f32 %v34, %v126
  %v128 = vpop.f32.mrb[0].mxu0
  %129 = vmatprep.mubr.f32.mxu0 0.0
  %130 = vmatmul.mubr.f32.gmra.mrb[0].mxu0 %v40
  %v131 = vpop.f32.mrb[0].mxu0
  %v132 = vadd.f32 %v34, %v131
  %v133 = vpop.f32.mrb[0].mxu0
  %134 = vmatprep.mubr.f32.mxu0 0.0
  %135 = vmatmul.mubr.f32.gmra.mrb[0].mxu0 %v43
  %v136 = vpop.f32.mrb[0].mxu0
  %v137 = vadd.f32 %v34, %v136
  %v138 = vpop.f32.mrb[0].mxu0
  %139 = vmatprep.mubr.f32.mxu0 0.0
  %140 = vmatmul.mubr.f32.gmra.mrb[0].mxu0 %v46
  %v141 = vpop.f32.mrb[0].mxu0
  %v142 = vadd.f32 %v34, %v141
  %v143 = vpop.f32.mrb[0].mxu0
  %144 = vmatprep.mubr.f32.mxu0 0.0
  %145 = vmatmul.mubr.f32.gmra.mrb[0].mxu0 %v49
  %v146 = vpop.f32.mrb[0].mxu0
  %v147 = vadd.f32 %v34, %v146
  %v148 = vpop.f32.mrb[0].mxu0
  %149 = vmatprep.mubr.f32.mxu0 0.0
  %150 = vmatmul.mubr.f32.gmra.mrb[0].mxu0 %v52
  %v151 = vpop.f32.mrb[0].mxu0
  %v152 = vadd.f32 %v34, %v151
  %v153 = vpop.f32.mrb[0].mxu0
  %154 = vmatprep.mubr.f32.mxu0 0.0
  %155 = vmatmul.mubr.f32.gmra.mrb[0].mxu0 %v55
  %v156 = vpop.f32.mrb[0].mxu0
  %v157 = vadd.f32 %v34, %v156
  %v158 = vpop.f32.mrb[0].mxu0
  %159 = vmatprep.mubr.f32.mxu0 0.0
  %160 = vmatmul.mubr.f32.gmra.mrb[0].mxu0 %v58
  %v161 = vpop.f32.mrb[0].mxu0
  %v162 = vadd.f32 %v34, %v161
  %v163 = vpop.f32.mrb[0].mxu0
  %164 = vdwg.mxu0
  %vm165 = vcmask 261120
  %v167 = vsel %vm165, 0.0, 0
  %169 = vmatprep.subr.mxu0 0.0
  %170 = vmatpush1.msra.mxu0 %v13
  %171 = vmatprep.subr.mxu0 0.0
  %172 = vmatpush1.msra.mxu0 %v14
  %173 = vmatprep.subr.mxu0 0.0
  %174 = vmatpush1.msra.mxu0 %v15
  %175 = vmatprep.subr.mxu0 0.0
  %176 = vmatpush1.msra.mxu0 %v16
  %177 = vmatprep.subr.mxu0 0.0
  %178 = vmatpush1.msra.mxu0 0.0
  %179 = vmatprep.subr.mxu0 0.0
  %180 = vmatpush1.msra.mxu0 0.0
  %181 = vmatprep.subr.mxu0 0.0
  %182 = vmatpush1.msra.mxu0 0.0
  %183 = vmatprep.subr.mxu0 0.0
  %184 = vmatpush1.msra.mxu0 0.0
  %185 = vmatprep.subr.mxu0 0.0
  %186 = vmatpush1.msra.mxu0 0.0
  %187 = vmatprep.subr.mxu0 0.0
  %188 = vmatpush1.msra.mxu0 0.0
  %189 = vmatprep.subr.mxu0 0.0
  %190 = vmatpush1.msra.mxu0 0.0
  %191 = vmatprep.subr.mxu0 0.0
  %192 = vmatpush1.msra.mxu0 0.0
  %193 = vmatprep.subr.mxu0 0.0
  %194 = vmatpush1.msra.mxu0 0.0
  %195 = vmatprep.subr.mxu0 0.0
  %196 = vmatpush1.msra.mxu0 0.0
  %197 = vmatprep.subr.mxu0 0.0
  %198 = vmatpush1.msra.mxu0 0.0
  %199 = vmatprep.subr.mxu0 0.0
  %200 = vmatpush1.msra.mxu0 0.0
  %201 = vmatprep.subr.mxu0 0.0
  %202 = vmatpush1.msra.mxu0 0.0
  %203 = vmatprep.subr.mxu0 0.0
  %204 = vmatpush1.msra.mxu0 0.0
  %205 = vmatprep.subr.mxu0 0.0
  %206 = vmatpush1.msra.mxu0 0.0
  %207 = vmatprep.subr.mxu0 0.0
  %208 = vmatpush1.msra.mxu0 0.0
  %209 = vmatprep.subr.mxu0 0.0
  %210 = vmatpush1.msra.mxu0 0.0
  %211 = vmatprep.subr.mxu0 0.0
  %212 = vmatpush1.msra.mxu0 0.0
  %213 = vmatprep.subr.mxu0 0.0
  %214 = vmatpush1.msra.mxu0 0.0
  %215 = vmatprep.subr.mxu0 0.0
  %216 = vmatpush1.msra.mxu0 0.0
  %217 = vmatprep.subr.mxu0 0.0
  %218 = vmatpush1.msra.mxu0 0.0
  %219 = vmatprep.subr.mxu0 0.0
  %220 = vmatpush1.msra.mxu0 0.0
  %221 = vmatprep.subr.mxu0 0.0
  %222 = vmatpush1.msra.mxu0 0.0
  %223 = vmatprep.subr.mxu0 0.0
  %224 = vmatpush1.msra.mxu0 0.0
  %225 = vmatprep.subr.mxu0 0.0
  %226 = vmatpush1.msra.mxu0 0.0
  %227 = vmatprep.subr.mxu0 0.0
  %228 = vmatpush1.msra.mxu0 0.0
  %229 = vmatprep.subr.mxu0 0.0
  %230 = vmatpush1.msra.mxu0 0.0
  %231 = vmatprep.subr.mxu0 0.0
  %232 = vmatpush1.msra.mxu0 0.0
  %233 = vmatprep.mubr.f32.mxu0 0.0
  %234 = vmatmul.mubr.f32.gmra.mrb[0].mxu0 %v167
  %v235 = vpop.f32.mrb[0].mxu0
  %v236 = vadd.f32 0.0, %v235
  %v237 = vpop.f32.mrb[0].mxu0
  %238 = vdwg.mxu0
  %v239 = vadd.f32 %v127, %v236
  %v240 = vmul.f32 %v239, 0.5
  %v241 = vtanh.pop %v240
  %v242 = vmul.f32 %v241, 0.5
  %v243 = vadd.f32 %v242, 0.5
  %v244 = vtanh.pop %v239
  %v245 = vmul.f32 %v243, 0.0
  %247 = vrot.lane.b32.xlu0 %v244, 64
  %v248 = vpop.permute.xlu0 %247
  %v250 = vmul.f32 %v243, %v248
  %252 = vrot.lane.b32.xlu0 %v250, 32
  %v253 = vpop.permute.xlu0 %252
  %v255 = vadd.f32 %v245, %v253
  %v256 = vtanh.pop %v255
  %258 = vrot.lane.b32.xlu0 %v256, 64
  %v259 = vpop.permute.xlu0 %258
  %v261 = vmul.f32 %v243, %v259
  %v262 = vadd.f32 %v261, 0.0
  %264 = vrot.lane.b32.xlu0 %v261, 32
  %v265 = vpop.permute.xlu0 %264
  %v266 = vsel %vm165, %v265, 0
  %268 = vmatprep.subr.mxu0 0.0
  %269 = vmatpush1.msra.mxu0 %v13
  %270 = vmatprep.subr.mxu0 0.0
  %271 = vmatpush1.msra.mxu0 %v14
  %272 = vmatprep.subr.mxu0 0.0
  %273 = vmatpush1.msra.mxu0 %v15
  %274 = vmatprep.subr.mxu0 0.0
  %275 = vmatpush1.msra.mxu0 %v16
  %276 = vmatprep.subr.mxu0 0.0
  %277 = vmatpush1.msra.mxu0 0.0
  %278 = vmatprep.subr.mxu0 0.0
  %279 = vmatpush1.msra.mxu0 0.0
  %280 = vmatprep.subr.mxu0 0.0
  %281 = vmatpush1.msra.mxu0 0.0
  %282 = vmatprep.subr.mxu0 0.0
  %283 = vmatpush1.msra.mxu0 0.0
  %284 = vmatprep.subr.mxu0 0.0
  %285 = vmatpush1.msra.mxu0 0.0
  %286 = vmatprep.subr.mxu0 0.0
  %287 = vmatpush1.msra.mxu0 0.0
  %288 = vmatprep.subr.mxu0 0.0
  %289 = vmatpush1.msra.mxu0 0.0
  %290 = vmatprep.subr.mxu0 0.0
  %291 = vmatpush1.msra.mxu0 0.0
  %292 = vmatprep.subr.mxu0 0.0
  %293 = vmatpush1.msra.mxu0 0.0
  %294 = vmatprep.subr.mxu0 0.0
  %295 = vmatpush1.msra.mxu0 0.0
  %296 = vmatprep.subr.mxu0 0.0
  %297 = vmatpush1.msra.mxu0 0.0
  %298 = vmatprep.subr.mxu0 0.0
  %299 = vmatpush1.msra.mxu0 0.0
  %300 = vmatprep.subr.mxu0 0.0
  %301 = vmatpush1.msra.mxu0 0.0
  %302 = vmatprep.subr.mxu0 0.0
  %303 = vmatpush1.msra.mxu0 0.0
  %304 = vmatprep.subr.mxu0 0.0
  %305 = vmatpush1.msra.mxu0 0.0
  %306 = vmatprep.subr.mxu0 0.0
  %307 = vmatpush1.msra.mxu0 0.0
  %308 = vmatprep.subr.mxu0 0.0
  %309 = vmatpush1.msra.mxu0 0.0
  %310 = vmatprep.subr.mxu0 0.0
  %311 = vmatpush1.msra.mxu0 0.0
  %312 = vmatprep.subr.mxu0 0.0
  %313 = vmatpush1.msra.mxu0 0.0
  %314 = vmatprep.subr.mxu0 0.0
  %315 = vmatpush1.msra.mxu0 0.0
  %316 = vmatprep.subr.mxu0 0.0
  %317 = vmatpush1.msra.mxu0 0.0
  %318 = vmatprep.subr.mxu0 0.0
  %319 = vmatpush1.msra.mxu0 0.0
  %320 = vmatprep.subr.mxu0 0.0
  %321 = vmatpush1.msra.mxu0 0.0
  %322 = vmatprep.subr.mxu0 0.0
  %323 = vmatpush1.msra.mxu0 0.0
  %324 = vmatprep.subr.mxu0 0.0
  %325 = vmatpush1.msra.mxu0 0.0
  %326 = vmatprep.subr.mxu0 0.0
  %327 = vmatpush1.msra.mxu0 0.0
  %328 = vmatprep.subr.mxu0 0.0
  %329 = vmatpush1.msra.mxu0 0.0
  %330 = vmatprep.subr.mxu0 0.0
  %331 = vmatpush1.msra.mxu0 0.0
  %332 = vmatprep.mubr.f32.mxu0 0.0
  %333 = vmatmul.mubr.f32.gmra.mrb[0].mxu0 %v266
  %v334 = vpop.f32.mrb[0].mxu0
  %v335 = vadd.f32 0.0, %v334
  %v336 = vpop.f32.mrb[0].mxu0
  %337 = vdwg.mxu0
  %v338 = vadd.f32 %v132, %v335
  %v339 = vmul.f32 %v338, 0.5
  %v340 = vtanh.pop %v339
  %v341 = vmul.f32 %v340, 0.5
  %v342 = vadd.f32 %v341, 0.5
  %v343 = vtanh.pop %v338
  %v344 = vmul.f32 %v342, %v255
  %346 = vrot.lane.b32.xlu0 %v343, 64
  %v347 = vpop.permute.xlu0 %346
  %v349 = vmul.f32 %v342, %v347
  %351 = vrot.lane.b32.xlu0 %v349, 32
  %v352 = vpop.permute.xlu0 %351
  %v354 = vadd.f32 %v344, %v352
  %v355 = vtanh.pop %v354
  %357 = vrot.lane.b32.xlu0 %v355, 64
  %v358 = vpop.permute.xlu0 %357
  %v360 = vmul.f32 %v342, %v358
  %v361 = vadd.f32 %v262, %v360
  %363 = vrot.lane.b32.xlu0 %v360, 32
  %v364 = vpop.permute.xlu0 %363
  %v365 = vsel %vm165, %v364, 0
  %367 = vmatprep.subr.mxu0 0.0
  %368 = vmatpush1.msra.mxu0 %v13
  %369 = vmatprep.subr.mxu0 0.0
  %370 = vmatpush1.msra.mxu0 %v14
  %371 = vmatprep.subr.mxu0 0.0
  %372 = vmatpush1.msra.mxu0 %v15
  %373 = vmatprep.subr.mxu0 0.0
  %374 = vmatpush1.msra.mxu0 %v16
  %375 = vmatprep.subr.mxu0 0.0
  %376 = vmatpush1.msra.mxu0 0.0
  %377 = vmatprep.subr.mxu0 0.0
  %378 = vmatpush1.msra.mxu0 0.0
  %379 = vmatprep.subr.mxu0 0.0
  %380 = vmatpush1.msra.mxu0 0.0
  %381 = vmatprep.subr.mxu0 0.0
  %382 = vmatpush1.msra.mxu0 0.0
  %383 = vmatprep.subr.mxu0 0.0
  %384 = vmatpush1.msra.mxu0 0.0
  %385 = vmatprep.subr.mxu0 0.0
  %386 = vmatpush1.msra.mxu0 0.0
  %387 = vmatprep.subr.mxu0 0.0
  %388 = vmatpush1.msra.mxu0 0.0
  %389 = vmatprep.subr.mxu0 0.0
  %390 = vmatpush1.msra.mxu0 0.0
  %391 = vmatprep.subr.mxu0 0.0
  %392 = vmatpush1.msra.mxu0 0.0
  %393 = vmatprep.subr.mxu0 0.0
  %394 = vmatpush1.msra.mxu0 0.0
  %395 = vmatprep.subr.mxu0 0.0
  %396 = vmatpush1.msra.mxu0 0.0
  %397 = vmatprep.subr.mxu0 0.0
  %398 = vmatpush1.msra.mxu0 0.0
  %399 = vmatprep.subr.mxu0 0.0
  %400 = vmatpush1.msra.mxu0 0.0
  %401 = vmatprep.subr.mxu0 0.0
  %402 = vmatpush1.msra.mxu0 0.0
  %403 = vmatprep.subr.mxu0 0.0
  %404 = vmatpush1.msra.mxu0 0.0
  %405 = vmatprep.subr.mxu0 0.0
  %406 = vmatpush1.msra.mxu0 0.0
  %407 = vmatprep.subr.mxu0 0.0
  %408 = vmatpush1.msra.mxu0 0.0
  %409 = vmatprep.subr.mxu0 0.0
  %410 = vmatpush1.msra.mxu0 0.0
  %411 = vmatprep.subr.mxu0 0.0
  %412 = vmatpush1.msra.mxu0 0.0
  %413 = vmatprep.subr.mxu0 0.0
  %414 = vmatpush1.msra.mxu0 0.0
  %415 = vmatprep.subr.mxu0 0.0
  %416 = vmatpush1.msra.mxu0 0.0
  %417 = vmatprep.subr.mxu0 0.0
  %418 = vmatpush1.msra.mxu0 0.0
  %419 = vmatprep.subr.mxu0 0.0
  %420 = vmatpush1.msra.mxu0 0.0
  %421 = vmatprep.subr.mxu0 0.0
  %422 = vmatpush1.msra.mxu0 0.0
  %423 = vmatprep.subr.mxu0 0.0
  %424 = vmatpush1.msra.mxu0 0.0
  %425 = vmatprep.subr.mxu0 0.0
  %426 = vmatpush1.msra.mxu0 0.0
  %427 = vmatprep.subr.mxu0 0.0
  %428 = vmatpush1.msra.mxu0 0.0
  %429 = vmatprep.subr.mxu0 0.0
  %430 = vmatpush1.msra.mxu0 0.0
  %431 = vmatprep.mubr.f32.mxu0 0.0
  %432 = vmatmul.mubr.f32.gmra.mrb[0].mxu0 %v365
  %v433 = vpop.f32.mrb[0].mxu0
  %v434 = vadd.f32 0.0, %v433
  %v435 = vpop.f32.mrb[0].mxu0
  %436 = vdwg.mxu0
  %v437 = vadd.f32 %v137, %v434
  %v438 = vmul.f32 %v437, 0.5
  %v439 = vtanh.pop %v438
  %v440 = vmul.f32 %v439, 0.5
  %v441 = vadd.f32 %v440, 0.5
  %v442 = vtanh.pop %v437
  %v443 = vmul.f32 %v441, %v354
  %445 = vrot.lane.b32.xlu0 %v442, 64
  %v446 = vpop.permute.xlu0 %445
  %v448 = vmul.f32 %v441, %v446
  %450 = vrot.lane.b32.xlu0 %v448, 32
  %v451 = vpop.permute.xlu0 %450
  %v453 = vadd.f32 %v443, %v451
  %v454 = vtanh.pop %v453
  %456 = vrot.lane.b32.xlu0 %v454, 64
  %v457 = vpop.permute.xlu0 %456
  %v459 = vmul.f32 %v441, %v457
  %v460 = vadd.f32 %v361, %v459
  %462 = vrot.lane.b32.xlu0 %v459, 32
  %v463 = vpop.permute.xlu0 %462
  %v464 = vsel %vm165, %v463, 0
  %466 = vmatprep.subr.mxu0 0.0
  %467 = vmatpush1.msra.mxu0 %v13
  %468 = vmatprep.subr.mxu0 0.0
  %469 = vmatpush1.msra.mxu0 %v14
  %470 = vmatprep.subr.mxu0 0.0
  %471 = vmatpush1.msra.mxu0 %v15
  %472 = vmatprep.subr.mxu0 0.0
  %473 = vmatpush1.msra.mxu0 %v16
  %474 = vmatprep.subr.mxu0 0.0
  %475 = vmatpush1.msra.mxu0 0.0
  %476 = vmatprep.subr.mxu0 0.0
  %477 = vmatpush1.msra.mxu0 0.0
  %478 = vmatprep.subr.mxu0 0.0
  %479 = vmatpush1.msra.mxu0 0.0
  %480 = vmatprep.subr.mxu0 0.0
  %481 = vmatpush1.msra.mxu0 0.0
  %482 = vmatprep.subr.mxu0 0.0
  %483 = vmatpush1.msra.mxu0 0.0
  %484 = vmatprep.subr.mxu0 0.0
  %485 = vmatpush1.msra.mxu0 0.0
  %486 = vmatprep.subr.mxu0 0.0
  %487 = vmatpush1.msra.mxu0 0.0
  %488 = vmatprep.subr.mxu0 0.0
  %489 = vmatpush1.msra.mxu0 0.0
  %490 = vmatprep.subr.mxu0 0.0
  %491 = vmatpush1.msra.mxu0 0.0
  %492 = vmatprep.subr.mxu0 0.0
  %493 = vmatpush1.msra.mxu0 0.0
  %494 = vmatprep.subr.mxu0 0.0
  %495 = vmatpush1.msra.mxu0 0.0
  %496 = vmatprep.subr.mxu0 0.0
  %497 = vmatpush1.msra.mxu0 0.0
  %498 = vmatprep.subr.mxu0 0.0
  %499 = vmatpush1.msra.mxu0 0.0
  %500 = vmatprep.subr.mxu0 0.0
  %501 = vmatpush1.msra.mxu0 0.0
  %502 = vmatprep.subr.mxu0 0.0
  %503 = vmatpush1.msra.mxu0 0.0
  %504 = vmatprep.subr.mxu0 0.0
  %505 = vmatpush1.msra.mxu0 0.0
  %506 = vmatprep.subr.mxu0 0.0
  %507 = vmatpush1.msra.mxu0 0.0
  %508 = vmatprep.subr.mxu0 0.0
  %509 = vmatpush1.msra.mxu0 0.0
  %510 = vmatprep.subr.mxu0 0.0
  %511 = vmatpush1.msra.mxu0 0.0
  %512 = vmatprep.subr.mxu0 0.0
  %513 = vmatpush1.msra.mxu0 0.0
  %514 = vmatprep.subr.mxu0 0.0
  %515 = vmatpush1.msra.mxu0 0.0
  %516 = vmatprep.subr.mxu0 0.0
  %517 = vmatpush1.msra.mxu0 0.0
  %518 = vmatprep.subr.mxu0 0.0
  %519 = vmatpush1.msra.mxu0 0.0
  %520 = vmatprep.subr.mxu0 0.0
  %521 = vmatpush1.msra.mxu0 0.0
  %522 = vmatprep.subr.mxu0 0.0
  %523 = vmatpush1.msra.mxu0 0.0
  %524 = vmatprep.subr.mxu0 0.0
  %525 = vmatpush1.msra.mxu0 0.0
  %526 = vmatprep.subr.mxu0 0.0
  %527 = vmatpush1.msra.mxu0 0.0
  %528 = vmatprep.subr.mxu0 0.0
  %529 = vmatpush1.msra.mxu0 0.0
  %530 = vmatprep.mubr.f32.mxu0 0.0
  %531 = vmatmul.mubr.f32.gmra.mrb[0].mxu0 %v464
  %v532 = vpop.f32.mrb[0].mxu0
  %v533 = vadd.f32 0.0, %v532
  %v534 = vpop.f32.mrb[0].mxu0
  %535 = vdwg.mxu0
  %v536 = vadd.f32 %v142, %v533
  %v537 = vmul.f32 %v536, 0.5
  %v538 = vtanh.pop %v537
  %v539 = vmul.f32 %v538, 0.5
  %v540 = vadd.f32 %v539, 0.5
  %v541 = vtanh.pop %v536
  %v542 = vmul.f32 %v540, %v453
  %544 = vrot.lane.b32.xlu0 %v541, 64
  %v545 = vpop.permute.xlu0 %544
  %v547 = vmul.f32 %v540, %v545
  %549 = vrot.lane.b32.xlu0 %v547, 32
  %v550 = vpop.permute.xlu0 %549
  %v552 = vadd.f32 %v542, %v550
  %v553 = vtanh.pop %v552
  %555 = vrot.lane.b32.xlu0 %v553, 64
  %v556 = vpop.permute.xlu0 %555
  %v558 = vmul.f32 %v540, %v556
  %v559 = vadd.f32 %v460, %v558
  %561 = vrot.lane.b32.xlu0 %v558, 32
  %v562 = vpop.permute.xlu0 %561
  %v563 = vsel %vm165, %v562, 0
  %565 = vmatprep.subr.mxu0 0.0
  %566 = vmatpush1.msra.mxu0 %v13
  %567 = vmatprep.subr.mxu0 0.0
  %568 = vmatpush1.msra.mxu0 %v14
  %569 = vmatprep.subr.mxu0 0.0
  %570 = vmatpush1.msra.mxu0 %v15
  %571 = vmatprep.subr.mxu0 0.0
  %572 = vmatpush1.msra.mxu0 %v16
  %573 = vmatprep.subr.mxu0 0.0
  %574 = vmatpush1.msra.mxu0 0.0
  %575 = vmatprep.subr.mxu0 0.0
  %576 = vmatpush1.msra.mxu0 0.0
  %577 = vmatprep.subr.mxu0 0.0
  %578 = vmatpush1.msra.mxu0 0.0
  %579 = vmatprep.subr.mxu0 0.0
  %580 = vmatpush1.msra.mxu0 0.0
  %581 = vmatprep.subr.mxu0 0.0
  %582 = vmatpush1.msra.mxu0 0.0
  %583 = vmatprep.subr.mxu0 0.0
  %584 = vmatpush1.msra.mxu0 0.0
  %585 = vmatprep.subr.mxu0 0.0
  %586 = vmatpush1.msra.mxu0 0.0
  %587 = vmatprep.subr.mxu0 0.0
  %588 = vmatpush1.msra.mxu0 0.0
  %589 = vmatprep.subr.mxu0 0.0
  %590 = vmatpush1.msra.mxu0 0.0
  %591 = vmatprep.subr.mxu0 0.0
  %592 = vmatpush1.msra.mxu0 0.0
  %593 = vmatprep.subr.mxu0 0.0
  %594 = vmatpush1.msra.mxu0 0.0
  %595 = vmatprep.subr.mxu0 0.0
  %596 = vmatpush1.msra.mxu0 0.0
  %597 = vmatprep.subr.mxu0 0.0
  %598 = vmatpush1.msra.mxu0 0.0
  %599 = vmatprep.subr.mxu0 0.0
  %600 = vmatpush1.msra.mxu0 0.0
  %601 = vmatprep.subr.mxu0 0.0
  %602 = vmatpush1.msra.mxu0 0.0
  %603 = vmatprep.subr.mxu0 0.0
  %604 = vmatpush1.msra.mxu0 0.0
  %605 = vmatprep.subr.mxu0 0.0
  %606 = vmatpush1.msra.mxu0 0.0
  %607 = vmatprep.subr.mxu0 0.0
  %608 = vmatpush1.msra.mxu0 0.0
  %609 = vmatprep.subr.mxu0 0.0
  %610 = vmatpush1.msra.mxu0 0.0
  %611 = vmatprep.subr.mxu0 0.0
  %612 = vmatpush1.msra.mxu0 0.0
  %613 = vmatprep.subr.mxu0 0.0
  %614 = vmatpush1.msra.mxu0 0.0
  %615 = vmatprep.subr.mxu0 0.0
  %616 = vmatpush1.msra.mxu0 0.0
  %617 = vmatprep.subr.mxu0 0.0
  %618 = vmatpush1.msra.mxu0 0.0
  %619 = vmatprep.subr.mxu0 0.0
  %620 = vmatpush1.msra.mxu0 0.0
  %621 = vmatprep.subr.mxu0 0.0
  %622 = vmatpush1.msra.mxu0 0.0
  %623 = vmatprep.subr.mxu0 0.0
  %624 = vmatpush1.msra.mxu0 0.0
  %625 = vmatprep.subr.mxu0 0.0
  %626 = vmatpush1.msra.mxu0 0.0
  %627 = vmatprep.subr.mxu0 0.0
  %628 = vmatpush1.msra.mxu0 0.0
  %629 = vmatprep.mubr.f32.mxu0 0.0
  %630 = vmatmul.mubr.f32.gmra.mrb[0].mxu0 %v563
  %v631 = vpop.f32.mrb[0].mxu0
  %v632 = vadd.f32 0.0, %v631
  %v633 = vpop.f32.mrb[0].mxu0
  %634 = vdwg.mxu0
  %v635 = vadd.f32 %v147, %v632
  %v636 = vmul.f32 %v635, 0.5
  %v637 = vtanh.pop %v636
  %v638 = vmul.f32 %v637, 0.5
  %v639 = vadd.f32 %v638, 0.5
  %v640 = vtanh.pop %v635
  %v641 = vmul.f32 %v639, %v552
  %643 = vrot.lane.b32.xlu0 %v640, 64
  %v644 = vpop.permute.xlu0 %643
  %v646 = vmul.f32 %v639, %v644
  %648 = vrot.lane.b32.xlu0 %v646, 32
  %v649 = vpop.permute.xlu0 %648
  %v651 = vadd.f32 %v641, %v649
  %v652 = vtanh.pop %v651
  %654 = vrot.lane.b32.xlu0 %v652, 64
  %v655 = vpop.permute.xlu0 %654
  %v657 = vmul.f32 %v639, %v655
  %v658 = vadd.f32 %v559, %v657
  %660 = vrot.lane.b32.xlu0 %v657, 32
  %v661 = vpop.permute.xlu0 %660
  %v662 = vsel %vm165, %v661, 0
  %664 = vmatprep.subr.mxu0 0.0
  %665 = vmatpush1.msra.mxu0 %v13
  %666 = vmatprep.subr.mxu0 0.0
  %667 = vmatpush1.msra.mxu0 %v14
  %668 = vmatprep.subr.mxu0 0.0
  %669 = vmatpush1.msra.mxu0 %v15
  %670 = vmatprep.subr.mxu0 0.0
  %671 = vmatpush1.msra.mxu0 %v16
  %672 = vmatprep.subr.mxu0 0.0
  %673 = vmatpush1.msra.mxu0 0.0
  %674 = vmatprep.subr.mxu0 0.0
  %675 = vmatpush1.msra.mxu0 0.0
  %676 = vmatprep.subr.mxu0 0.0
  %677 = vmatpush1.msra.mxu0 0.0
  %678 = vmatprep.subr.mxu0 0.0
  %679 = vmatpush1.msra.mxu0 0.0
  %680 = vmatprep.subr.mxu0 0.0
  %681 = vmatpush1.msra.mxu0 0.0
  %682 = vmatprep.subr.mxu0 0.0
  %683 = vmatpush1.msra.mxu0 0.0
  %684 = vmatprep.subr.mxu0 0.0
  %685 = vmatpush1.msra.mxu0 0.0
  %686 = vmatprep.subr.mxu0 0.0
  %687 = vmatpush1.msra.mxu0 0.0
  %688 = vmatprep.subr.mxu0 0.0
  %689 = vmatpush1.msra.mxu0 0.0
  %690 = vmatprep.subr.mxu0 0.0
  %691 = vmatpush1.msra.mxu0 0.0
  %692 = vmatprep.subr.mxu0 0.0
  %693 = vmatpush1.msra.mxu0 0.0
  %694 = vmatprep.subr.mxu0 0.0
  %695 = vmatpush1.msra.mxu0 0.0
  %696 = vmatprep.subr.mxu0 0.0
  %697 = vmatpush1.msra.mxu0 0.0
  %698 = vmatprep.subr.mxu0 0.0
  %699 = vmatpush1.msra.mxu0 0.0
  %700 = vmatprep.subr.mxu0 0.0
  %701 = vmatpush1.msra.mxu0 0.0
  %702 = vmatprep.subr.mxu0 0.0
  %703 = vmatpush1.msra.mxu0 0.0
  %704 = vmatprep.subr.mxu0 0.0
  %705 = vmatpush1.msra.mxu0 0.0
  %706 = vmatprep.subr.mxu0 0.0
  %707 = vmatpush1.msra.mxu0 0.0
  %708 = vmatprep.subr.mxu0 0.0
  %709 = vmatpush1.msra.mxu0 0.0
  %710 = vmatprep.subr.mxu0 0.0
  %711 = vmatpush1.msra.mxu0 0.0
  %712 = vmatprep.subr.mxu0 0.0
  %713 = vmatpush1.msra.mxu0 0.0
  %714 = vmatprep.subr.mxu0 0.0
  %715 = vmatpush1.msra.mxu0 0.0
  %716 = vmatprep.subr.mxu0 0.0
  %717 = vmatpush1.msra.mxu0 0.0
  %718 = vmatprep.subr.mxu0 0.0
  %719 = vmatpush1.msra.mxu0 0.0
  %720 = vmatprep.subr.mxu0 0.0
  %721 = vmatpush1.msra.mxu0 0.0
  %722 = vmatprep.subr.mxu0 0.0
  %723 = vmatpush1.msra.mxu0 0.0
  %724 = vmatprep.subr.mxu0 0.0
  %725 = vmatpush1.msra.mxu0 0.0
  %726 = vmatprep.subr.mxu0 0.0
  %727 = vmatpush1.msra.mxu0 0.0
  %728 = vmatprep.mubr.f32.mxu0 0.0
  %729 = vmatmul.mubr.f32.gmra.mrb[0].mxu0 %v662
  %v730 = vpop.f32.mrb[0].mxu0
  %v731 = vadd.f32 0.0, %v730
  %v732 = vpop.f32.mrb[0].mxu0
  %733 = vdwg.mxu0
  %v734 = vadd.f32 %v152, %v731
  %v735 = vmul.f32 %v734, 0.5
  %v736 = vtanh.pop %v735
  %v737 = vmul.f32 %v736, 0.5
  %v738 = vadd.f32 %v737, 0.5
  %v739 = vtanh.pop %v734
  %v740 = vmul.f32 %v738, %v651
  %742 = vrot.lane.b32.xlu0 %v739, 64
  %v743 = vpop.permute.xlu0 %742
  %v745 = vmul.f32 %v738, %v743
  %747 = vrot.lane.b32.xlu0 %v745, 32
  %v748 = vpop.permute.xlu0 %747
  %v750 = vadd.f32 %v740, %v748
  %v751 = vtanh.pop %v750
  %753 = vrot.lane.b32.xlu0 %v751, 64
  %v754 = vpop.permute.xlu0 %753
  %v756 = vmul.f32 %v738, %v754
  %v757 = vadd.f32 %v658, %v756
  %759 = vrot.lane.b32.xlu0 %v756, 32
  %v760 = vpop.permute.xlu0 %759
  %v761 = vsel %vm165, %v760, 0
  %763 = vmatprep.subr.mxu0 0.0
  %764 = vmatpush1.msra.mxu0 %v13
  %765 = vmatprep.subr.mxu0 0.0
  %766 = vmatpush1.msra.mxu0 %v14
  %767 = vmatprep.subr.mxu0 0.0
  %768 = vmatpush1.msra.mxu0 %v15
  %769 = vmatprep.subr.mxu0 0.0
  %770 = vmatpush1.msra.mxu0 %v16
  %771 = vmatprep.subr.mxu0 0.0
  %772 = vmatpush1.msra.mxu0 0.0
  %773 = vmatprep.subr.mxu0 0.0
  %774 = vmatpush1.msra.mxu0 0.0
  %775 = vmatprep.subr.mxu0 0.0
  %776 = vmatpush1.msra.mxu0 0.0
  %777 = vmatprep.subr.mxu0 0.0
  %778 = vmatpush1.msra.mxu0 0.0
  %779 = vmatprep.subr.mxu0 0.0
  %780 = vmatpush1.msra.mxu0 0.0
  %781 = vmatprep.subr.mxu0 0.0
  %782 = vmatpush1.msra.mxu0 0.0
  %783 = vmatprep.subr.mxu0 0.0
  %784 = vmatpush1.msra.mxu0 0.0
  %785 = vmatprep.subr.mxu0 0.0
  %786 = vmatpush1.msra.mxu0 0.0
  %787 = vmatprep.subr.mxu0 0.0
  %788 = vmatpush1.msra.mxu0 0.0
  %789 = vmatprep.subr.mxu0 0.0
  %790 = vmatpush1.msra.mxu0 0.0
  %791 = vmatprep.subr.mxu0 0.0
  %792 = vmatpush1.msra.mxu0 0.0
  %793 = vmatprep.subr.mxu0 0.0
  %794 = vmatpush1.msra.mxu0 0.0
  %795 = vmatprep.subr.mxu0 0.0
  %796 = vmatpush1.msra.mxu0 0.0
  %797 = vmatprep.subr.mxu0 0.0
  %798 = vmatpush1.msra.mxu0 0.0
  %799 = vmatprep.subr.mxu0 0.0
  %800 = vmatpush1.msra.mxu0 0.0
  %801 = vmatprep.subr.mxu0 0.0
  %802 = vmatpush1.msra.mxu0 0.0
  %803 = vmatprep.subr.mxu0 0.0
  %804 = vmatpush1.msra.mxu0 0.0
  %805 = vmatprep.subr.mxu0 0.0
  %806 = vmatpush1.msra.mxu0 0.0
  %807 = vmatprep.subr.mxu0 0.0
  %808 = vmatpush1.msra.mxu0 0.0
  %809 = vmatprep.subr.mxu0 0.0
  %810 = vmatpush1.msra.mxu0 0.0
  %811 = vmatprep.subr.mxu0 0.0
  %812 = vmatpush1.msra.mxu0 0.0
  %813 = vmatprep.subr.mxu0 0.0
  %814 = vmatpush1.msra.mxu0 0.0
  %815 = vmatprep.subr.mxu0 0.0
  %816 = vmatpush1.msra.mxu0 0.0
  %817 = vmatprep.subr.mxu0 0.0
  %818 = vmatpush1.msra.mxu0 0.0
  %819 = vmatprep.subr.mxu0 0.0
  %820 = vmatpush1.msra.mxu0 0.0
  %821 = vmatprep.subr.mxu0 0.0
  %822 = vmatpush1.msra.mxu0 0.0
  %823 = vmatprep.subr.mxu0 0.0
  %824 = vmatpush1.msra.mxu0 0.0
  %825 = vmatprep.subr.mxu0 0.0
  %826 = vmatpush1.msra.mxu0 0.0
  %827 = vmatprep.mubr.f32.mxu0 0.0
  %828 = vmatmul.mubr.f32.gmra.mrb[0].mxu0 %v761
  %v829 = vpop.f32.mrb[0].mxu0
  %v830 = vadd.f32 0.0, %v829
  %v831 = vpop.f32.mrb[0].mxu0
  %832 = vdwg.mxu0
  %v833 = vadd.f32 %v157, %v830
  %v834 = vmul.f32 %v833, 0.5
  %v835 = vtanh.pop %v834
  %v836 = vmul.f32 %v835, 0.5
  %v837 = vadd.f32 %v836, 0.5
  %v838 = vtanh.pop %v833
  %v839 = vmul.f32 %v837, %v750
  %841 = vrot.lane.b32.xlu0 %v838, 64
  %v842 = vpop.permute.xlu0 %841
  %v844 = vmul.f32 %v837, %v842
  %846 = vrot.lane.b32.xlu0 %v844, 32
  %v847 = vpop.permute.xlu0 %846
  %v849 = vadd.f32 %v839, %v847
  %v850 = vtanh.pop %v849
  %852 = vrot.lane.b32.xlu0 %v850, 64
  %v853 = vpop.permute.xlu0 %852
  %v855 = vmul.f32 %v837, %v853
  %v856 = vadd.f32 %v757, %v855
  %858 = vrot.lane.b32.xlu0 %v855, 32
  %v859 = vpop.permute.xlu0 %858
  %v860 = vsel %vm165, %v859, 0
  %862 = vmatprep.subr.mxu0 0.0
  %863 = vmatpush1.msra.mxu0 %v13
  %864 = vmatprep.subr.mxu0 0.0
  %865 = vmatpush1.msra.mxu0 %v14
  %866 = vmatprep.subr.mxu0 0.0
  %867 = vmatpush1.msra.mxu0 %v15
  %868 = vmatprep.subr.mxu0 0.0
  %869 = vmatpush1.msra.mxu0 %v16
  %870 = vmatprep.subr.mxu0 0.0
  %871 = vmatpush1.msra.mxu0 0.0
  %872 = vmatprep.subr.mxu0 0.0
  %873 = vmatpush1.msra.mxu0 0.0
  %874 = vmatprep.subr.mxu0 0.0
  %875 = vmatpush1.msra.mxu0 0.0
  %876 = vmatprep.subr.mxu0 0.0
  %877 = vmatpush1.msra.mxu0 0.0
  %878 = vmatprep.subr.mxu0 0.0
  %879 = vmatpush1.msra.mxu0 0.0
  %880 = vmatprep.subr.mxu0 0.0
  %881 = vmatpush1.msra.mxu0 0.0
  %882 = vmatprep.subr.mxu0 0.0
  %883 = vmatpush1.msra.mxu0 0.0
  %884 = vmatprep.subr.mxu0 0.0
  %885 = vmatpush1.msra.mxu0 0.0
  %886 = vmatprep.subr.mxu0 0.0
  %887 = vmatpush1.msra.mxu0 0.0
  %888 = vmatprep.subr.mxu0 0.0
  %889 = vmatpush1.msra.mxu0 0.0
  %890 = vmatprep.subr.mxu0 0.0
  %891 = vmatpush1.msra.mxu0 0.0
  %892 = vmatprep.subr.mxu0 0.0
  %893 = vmatpush1.msra.mxu0 0.0
  %894 = vmatprep.subr.mxu0 0.0
  %895 = vmatpush1.msra.mxu0 0.0
  %896 = vmatprep.subr.mxu0 0.0
  %897 = vmatpush1.msra.mxu0 0.0
  %898 = vmatprep.subr.mxu0 0.0
  %899 = vmatpush1.msra.mxu0 0.0
  %900 = vmatprep.subr.mxu0 0.0
  %901 = vmatpush1.msra.mxu0 0.0
  %902 = vmatprep.subr.mxu0 0.0
  %903 = vmatpush1.msra.mxu0 0.0
  %904 = vmatprep.subr.mxu0 0.0
  %905 = vmatpush1.msra.mxu0 0.0
  %906 = vmatprep.subr.mxu0 0.0
  %907 = vmatpush1.msra.mxu0 0.0
  %908 = vmatprep.subr.mxu0 0.0
  %909 = vmatpush1.msra.mxu0 0.0
  %910 = vmatprep.subr.mxu0 0.0
  %911 = vmatpush1.msra.mxu0 0.0
  %912 = vmatprep.subr.mxu0 0.0
  %913 = vmatpush1.msra.mxu0 0.0
  %914 = vmatprep.subr.mxu0 0.0
  %915 = vmatpush1.msra.mxu0 0.0
  %916 = vmatprep.subr.mxu0 0.0
  %917 = vmatpush1.msra.mxu0 0.0
  %918 = vmatprep.subr.mxu0 0.0
  %919 = vmatpush1.msra.mxu0 0.0
  %920 = vmatprep.subr.mxu0 0.0
  %921 = vmatpush1.msra.mxu0 0.0
  %922 = vmatprep.subr.mxu0 0.0
  %923 = vmatpush1.msra.mxu0 0.0
  %924 = vmatprep.subr.mxu0 0.0
  %925 = vmatpush1.msra.mxu0 0.0
  %926 = vmatprep.mubr.f32.mxu0 0.0
  %927 = vmatmul.mubr.f32.gmra.mrb[0].mxu0 %v860
  %v928 = vpop.f32.mrb[0].mxu0
  %v929 = vadd.f32 0.0, %v928
  %v930 = vpop.f32.mrb[0].mxu0
  %931 = vdwg.mxu0
  %v932 = vadd.f32 %v162, %v929
  %v933 = vmul.f32 %v932, 0.5
  %v934 = vtanh.pop %v933
  %v935 = vmul.f32 %v934, 0.5
  %v936 = vadd.f32 %v935, 0.5
  %v937 = vtanh.pop %v932
  %v938 = vmul.f32 %v936, %v849
  %940 = vrot.lane.b32.xlu0 %v937, 64
  %v941 = vpop.permute.xlu0 %940
  %v943 = vmul.f32 %v936, %v941
  %945 = vrot.lane.b32.xlu0 %v943, 32
  %v946 = vpop.permute.xlu0 %945
  %v948 = vadd.f32 %v938, %v946
  %v949 = vtanh.pop %v948
  %951 = vrot.lane.b32.xlu0 %v949, 64
  %v952 = vpop.permute.xlu0 %951
  %v954 = vmul.f32 %v936, %v952
  %v955 = vadd.f32 %v856, %v954
  %v956 = vmax.f32 %v955, 0.0
  %v957 = vlaneseq
  %v958 = vshrl.u32 %v957, 7
  %v959 = vsub.s32 0, %v958
  %v960 = vrot.slane %v22, %v959
  %962 = vrot.lane.b32.xlu0 %v956, 32
  %v963 = vpop.permute.xlu0 %962
  %v964 = vsel %vm165, %v963, 0
  %966 = vmatprep.subr.mxu0 0.0
  %967 = vmatpush1.msra.mxu0 %v17
  %968 = vmatprep.subr.mxu0 0.0
  %969 = vmatpush1.msra.mxu0 %v18
  %970 = vmatprep.subr.mxu0 0.0
  %971 = vmatpush1.msra.mxu0 %v19
  %972 = vmatprep.subr.mxu0 0.0
  %973 = vmatpush1.msra.mxu0 %v20
  %974 = vmatprep.subr.mxu0 0.0
  %975 = vmatpush1.msra.mxu0 0.0
  %976 = vmatprep.subr.mxu0 0.0
  %977 = vmatpush1.msra.mxu0 0.0
  %978 = vmatprep.subr.mxu0 0.0
  %979 = vmatpush1.msra.mxu0 0.0
  %980 = vmatprep.subr.mxu0 0.0
  %981 = vmatpush1.msra.mxu0 0.0
  %982 = vmatprep.subr.mxu0 0.0
  %983 = vmatpush1.msra.mxu0 0.0
  %984 = vmatprep.subr.mxu0 0.0
  %985 = vmatpush1.msra.mxu0 0.0
  %986 = vmatprep.subr.mxu0 0.0
  %987 = vmatpush1.msra.mxu0 0.0
  %988 = vmatprep.subr.mxu0 0.0
  %989 = vmatpush1.msra.mxu0 0.0
  %990 = vmatprep.subr.mxu0 0.0
  %991 = vmatpush1.msra.mxu0 0.0
  %992 = vmatprep.subr.mxu0 0.0
  %993 = vmatpush1.msra.mxu0 0.0
  %994 = vmatprep.subr.mxu0 0.0
  %995 = vmatpush1.msra.mxu0 0.0
  %996 = vmatprep.subr.mxu0 0.0
  %997 = vmatpush1.msra.mxu0 0.0
  %998 = vmatprep.subr.mxu0 0.0
  %999 = vmatpush1.msra.mxu0 0.0
  %1000 = vmatprep.subr.mxu0 0.0
  %1001 = vmatpush1.msra.mxu0 0.0
  %1002 = vmatprep.subr.mxu0 0.0
  %1003 = vmatpush1.msra.mxu0 0.0
  %1004 = vmatprep.subr.mxu0 0.0
  %1005 = vmatpush1.msra.mxu0 0.0
  %1006 = vmatprep.subr.mxu0 0.0
  %1007 = vmatpush1.msra.mxu0 0.0
  %1008 = vmatprep.subr.mxu0 0.0
  %1009 = vmatpush1.msra.mxu0 0.0
  %1010 = vmatprep.subr.mxu0 0.0
  %1011 = vmatpush1.msra.mxu0 0.0
  %1012 = vmatprep.subr.mxu0 0.0
  %1013 = vmatpush1.msra.mxu0 0.0
  %1014 = vmatprep.subr.mxu0 0.0
  %1015 = vmatpush1.msra.mxu0 0.0
  %1016 = vmatprep.subr.mxu0 0.0
  %1017 = vmatpush1.msra.mxu0 0.0
  %1018 = vmatprep.subr.mxu0 0.0
  %1019 = vmatpush1.msra.mxu0 0.0
  %1020 = vmatprep.subr.mxu0 0.0
  %1021 = vmatpush1.msra.mxu0 0.0
  %1022 = vmatprep.subr.mxu0 0.0
  %1023 = vmatpush1.msra.mxu0 0.0
  %1024 = vmatprep.subr.mxu0 0.0
  %1025 = vmatpush1.msra.mxu0 0.0
  %1026 = vmatprep.subr.mxu0 0.0
  %1027 = vmatpush1.msra.mxu0 0.0
  %1028 = vmatprep.subr.mxu0 0.0
  %1029 = vmatpush1.msra.mxu0 0.0
  %1030 = vmatprep.mubr.f32.mxu0 0.0
  %1031 = vmatmul.mubr.f32.gmra.mrb[0].mxu0 %v964
  %v1032 = vpop.f32.mrb[0].mxu0
  %v1033 = vadd.f32 %v960, %v1032
  %v1034 = vpop.f32.mrb[0].mxu0
  %1035 = vdwg.mxu0
  %1036 = vst [vmem:[%s2] sm:$0xff] %v1033
  // Predicated region
  $region10: #{lstm_tagger_forward.1} parent=0 // pred_check
    _
  $region11: #{lstm_tagger_forward.1} parent=0 // pred_check_branch
    %1038 = sbr.rel (0) target = $region13
  $region12: #{lstm_tagger_forward.1} parent=0 // pred_region
    _
  $region13: #{lstm_tagger_forward.1} parent=0 // pred_fallthru
    _
  // Predicated region
  $region14: #{lstm_tagger_forward.1} parent=0 // pred_check
    _
  $region15: #{lstm_tagger_forward.1} parent=0 // pred_check_branch
    %1040 = sbr.rel (0) target = $region17
  $region16: #{lstm_tagger_forward.1} parent=0 // pred_region
    _
  $region17: #{lstm_tagger_forward.1} parent=0 // pred_fallthru
    _

</llo_original>
